<compile_context>
chip_gen: v5e
topology: v5e:2x2
jax: 0.10.0
libtpu: 0.0.40
codegen_flags: <defaults>
</compile_context>

<pallas_src>
import jax
import jax.numpy as jnp
from jax.experimental import pallas as pl
from jax.experimental.pallas import tpu as pltpu


_LANE = 128
_MAX_STEP_BYTES = 4 << 20   # per-step (input + output) slab cap, f32
_MAX_BATCH_BLOCK = 8        # bound trace-time unroll of the batch loop


def _channel_mix_kernel(x_ref, w_ref, b_ref, o_ref):
    """Per-block channel mix on the VPU with full-sublane-occupancy tiles.

    x_ref : VMEM [Bblk, Cin,  S, L]   (L = lane dim, S sublane rows)
    w_ref : SMEM [Cin, Cout]          (scalars)
    b_ref : SMEM [Cout]               (scalars)
    o_ref : VMEM [Bblk, Cout, S, L]
    """
    bblk, cin = x_ref.shape[0], x_ref.shape[1]
    cout = o_ref.shape[1]

    for b in range(bblk):
        # Load each input channel once as a full [S, L] 2-D tile.
        x_tiles = [x_ref[b, ci] for ci in range(cin)]
        for co in range(cout):
            acc = x_tiles[0] * w_ref[0, co]
            for ci in range(1, cin):
                acc = acc + x_tiles[ci] * w_ref[ci, co]
            # One unmasked, lane- and sublane-dense full-tile store per channel.
            o_ref[b, co] = (acc + b_ref[co]).astype(o_ref.dtype)


def _pick_tiles(B, Cin, Cout, s_total):
    """Choose (batch_block, spatial_block) for the grid.

    Targets a per-step slab (input + output, f32) of up to ~4 MiB so the
    double-buffered footprint stays well under v7x's VMEM budget while being
    large enough to amortize per-step overhead, and keeps >= 2 parallel grid
    blocks so v7x megacore sharding has work for both TensorCores.
    """
    bytes_per_row = (Cin + Cout) * _LANE * 4      # in + out per (batch, sublane-row)
    max_rows = max(1, _MAX_STEP_BYTES // bytes_per_row)

    # Spatial block: largest multiple-of-8 divisor of s_total within budget.
    best = 0
    d = 8
    while d <= min(s_total, max_rows):
        if s_total % d == 0:
            best = d
        d += 8
    if best:
        s_blk = best
    elif s_total % 8 == 0:
        s_blk = 8                 # budget smaller than 8 rows: minimum legal tile
    else:
        s_blk = s_total           # block == full array dim (allowed by Mosaic)
    ns = s_total // s_blk

    # Batch block: fold batch elements into a step when the spatial slab is
    # small, but never collapse the grid below 2 parallel blocks.
    b_blk = 1
    rows_left = max(1, max_rows // s_blk)
    cap = min(B, rows_left, _MAX_BATCH_BLOCK)
    for cand in range(cap, 0, -1):
        if B % cand == 0 and (B // cand) * ns >= 2:
            b_blk = cand
            break
    return b_blk, s_blk


def pallas_pointwise_conv(x_nchw, weight, bias):
    """1x1 conv (channel-mixing linear) via a lane-dense Pallas VPU kernel.

    x_nchw : [B, Cin, H, W]  float32
    weight : [Cin, Cout]     float32
    bias   : [Cout]          float32
    returns: [B, Cout, H, W] float32
    """
    B, Cin, H, W = x_nchw.shape
    Cout = weight.shape[1]
    HW = H * W

    if HW % _LANE == 0:
        s_total, lane = HW // _LANE, _LANE
    else:
        # TODO(synk): ragged spatial extents fall back to a single lane-tail
        # block (legal, masked tail stores) — not exercised by the demo shape.
        s_total, lane = 1, HW

    # Pure contiguous reshape: last dim is the lane axis, second-last sublanes.
    x4 = x_nchw.reshape(B, Cin, s_total, lane)

    b_blk, s_blk = _pick_tiles(B, Cin, Cout, s_total)
    grid = (B // b_blk, s_total // s_blk)

    out4 = pl.pallas_call(
        _channel_mix_kernel,
        out_shape=jax.ShapeDtypeStruct((B, Cout, s_total, lane), x_nchw.dtype),
        grid=grid,
        in_specs=[
            # x: one (b_blk, Cin, s_blk, lane) slab per grid step.
            pl.BlockSpec((b_blk, Cin, s_blk, lane), lambda bi, sj: (bi, 0, sj, 0)),
            # weight / bias: tiny scalar tables resident in SMEM (no per-step DMA).
            pl.BlockSpec(memory_space=pltpu.MemorySpace.SMEM),
            pl.BlockSpec(memory_space=pltpu.MemorySpace.SMEM),
        ],
        out_specs=pl.BlockSpec(
            (b_blk, Cout, s_blk, lane), lambda bi, sj: (bi, 0, sj, 0)
        ),
        compiler_params=pltpu.CompilerParams(
            dimension_semantics=("parallel", "parallel"),
            vmem_limit_bytes=32 * 1024 * 1024,
        ),
    )(x4, weight, bias)

    # Pure reshape back to NCHW — no transpose anywhere.
    return out4.reshape(B, Cout, H, W)


class InnerModel:
    """Representative inner `model` passed to DummyModel: 1x1 Conv2d(4 -> 8)."""

    def __init__(self, cin, cout, key):
        kw, kb = jax.random.split(key)
        self.weight = jax.random.normal(kw, (cin, cout), jnp.float32) * (1.0 / cin ** 0.5)
        self.bias = jax.random.normal(kb, (cout,), jnp.float32) * 0.01

    def __call__(self, x):
        return pallas_pointwise_conv(x, self.weight, self.bias)


class DummyModel:
    """Faithful port of the PyTorch DummyModel wrapper: forward(x) = model(x)."""

    def __init__(self, model):
        self.model = model

    def __call__(self, x, *args, **kwargs):
        return self.model(x)


if __name__ == "__main__":
    key = jax.random.PRNGKey(0)
    k_in, k_param = jax.random.split(key)

    B, Cin, H, W = 2, 4, 16, 16
    Cout = 8
    x = jax.random.normal(k_in, (B, Cin, H, W), jnp.float32)

    inner = InnerModel(Cin, Cout, k_param)
    dummy = DummyModel(inner)

    out = dummy(x)
    out = jax.block_until_ready(out)

    # Sanity check against plain-JAX reference of the inner model.
    ref = jnp.einsum("bchw,co->bohw", x, inner.weight) + inner.bias[None, :, None, None]
    assert out.shape == (B, Cout, H, W)
    assert jnp.allclose(out, ref, atol=1e-5, rtol=1e-5)

    print("KERNEL_OK")
</pallas_src>

<mosaic_0001>
module attributes {stable_mosaic.version = 11 : i64} {
  func.func @_channel_mix_kernel(%arg0: i32, %arg1: i32, %arg2: memref<1x4x2x128xf32, #tpu.memory_space<vmem>>, %arg3: memref<4x8xf32, #tpu.memory_space<smem>>, %arg4: memref<8xf32, #tpu.memory_space<smem>>, %arg5: memref<1x8x2x128xf32, #tpu.memory_space<vmem>>) attributes {dimension_semantics = [#tpu.dimension_semantics<parallel>, #tpu.dimension_semantics<parallel>], iteration_bounds = array<i64: 2, 1>, scalar_prefetch = 0 : i64, scratch_operands = 0 : i64, tpu.core_type = #tpu.core_type<tc>, window_params = [{transform_indices = @transform_0, window_bounds = array<i64: 1, 4, 2, 128>}, {transform_indices = @transform_1, window_bounds = array<i64: 4, 8>}, {transform_indices = @transform_2, window_bounds = array<i64: 8>}, {transform_indices = @transform_3, window_bounds = array<i64: 1, 8, 2, 128>}]} {
    %c0 = arith.constant 0 : index
    %c0_0 = arith.constant 0 : index
    %c0_1 = arith.constant 0 : index
    %c0_2 = arith.constant 0 : index
    %0 = vector.load %arg2[%c0, %c0_0, %c0_1, %c0_2] : memref<1x4x2x128xf32, #tpu.memory_space<vmem>>, vector<1x1x2x128xf32>
    %1 = vector.shape_cast %0 : vector<1x1x2x128xf32> to vector<2x128xf32>
    %c0_3 = arith.constant 0 : index
    %c1 = arith.constant 1 : index
    %c0_4 = arith.constant 0 : index
    %c0_5 = arith.constant 0 : index
    %2 = vector.load %arg2[%c0_3, %c1, %c0_4, %c0_5] : memref<1x4x2x128xf32, #tpu.memory_space<vmem>>, vector<1x1x2x128xf32>
    %3 = vector.shape_cast %2 : vector<1x1x2x128xf32> to vector<2x128xf32>
    %c0_6 = arith.constant 0 : index
    %c2 = arith.constant 2 : index
    %c0_7 = arith.constant 0 : index
    %c0_8 = arith.constant 0 : index
    %4 = vector.load %arg2[%c0_6, %c2, %c0_7, %c0_8] : memref<1x4x2x128xf32, #tpu.memory_space<vmem>>, vector<1x1x2x128xf32>
    %5 = vector.shape_cast %4 : vector<1x1x2x128xf32> to vector<2x128xf32>
    %c0_9 = arith.constant 0 : index
    %c3 = arith.constant 3 : index
    %c0_10 = arith.constant 0 : index
    %c0_11 = arith.constant 0 : index
    %6 = vector.load %arg2[%c0_9, %c3, %c0_10, %c0_11] : memref<1x4x2x128xf32, #tpu.memory_space<vmem>>, vector<1x1x2x128xf32>
    %7 = vector.shape_cast %6 : vector<1x1x2x128xf32> to vector<2x128xf32>
    %c0_12 = arith.constant 0 : index
    %c0_13 = arith.constant 0 : index
    %8 = memref.load %arg3[%c0_12, %c0_13] : memref<4x8xf32, #tpu.memory_space<smem>>
    %9 = vector.broadcast %8 : f32 to vector<2x128xf32>
    %10 = arith.mulf %1, %9 : vector<2x128xf32>
    %c1_14 = arith.constant 1 : index
    %c0_15 = arith.constant 0 : index
    %11 = memref.load %arg3[%c1_14, %c0_15] : memref<4x8xf32, #tpu.memory_space<smem>>
    %12 = vector.broadcast %11 : f32 to vector<2x128xf32>
    %13 = arith.mulf %3, %12 : vector<2x128xf32>
    %14 = arith.addf %10, %13 : vector<2x128xf32>
    %c2_16 = arith.constant 2 : index
    %c0_17 = arith.constant 0 : index
    %15 = memref.load %arg3[%c2_16, %c0_17] : memref<4x8xf32, #tpu.memory_space<smem>>
    %16 = vector.broadcast %15 : f32 to vector<2x128xf32>
    %17 = arith.mulf %5, %16 : vector<2x128xf32>
    %18 = arith.addf %14, %17 : vector<2x128xf32>
    %c3_18 = arith.constant 3 : index
    %c0_19 = arith.constant 0 : index
    %19 = memref.load %arg3[%c3_18, %c0_19] : memref<4x8xf32, #tpu.memory_space<smem>>
    %20 = vector.broadcast %19 : f32 to vector<2x128xf32>
    %21 = arith.mulf %7, %20 : vector<2x128xf32>
    %22 = arith.addf %18, %21 : vector<2x128xf32>
    %c0_20 = arith.constant 0 : index
    %23 = memref.load %arg4[%c0_20] : memref<8xf32, #tpu.memory_space<smem>>
    %24 = vector.broadcast %23 : f32 to vector<2x128xf32>
    %25 = arith.addf %22, %24 : vector<2x128xf32>
    %c0_21 = arith.constant 0 : index
    %c0_22 = arith.constant 0 : index
    %c0_23 = arith.constant 0 : index
    %c0_24 = arith.constant 0 : index
    %26 = vector.load %arg5[%c0_21, %c0_22, %c0_23, %c0_24] : memref<1x8x2x128xf32, #tpu.memory_space<vmem>>, vector<1x1x2x128xf32>
    %27 = vector.shape_cast %26 : vector<1x1x2x128xf32> to vector<2x128xf32>
    %28 = vector.shape_cast %25 : vector<2x128xf32> to vector<1x1x2x128xf32>
    tpu.vector_store %arg5[%c0_21, %c0_22, %c0_23, %c0_24], %28 {strides = array<i32>} : memref<1x8x2x128xf32, #tpu.memory_space<vmem>>, vector<1x1x2x128xf32>,
    %c0_25 = arith.constant 0 : index
    %c1_26 = arith.constant 1 : index
    %29 = memref.load %arg3[%c0_25, %c1_26] : memref<4x8xf32, #tpu.memory_space<smem>>
    %30 = vector.broadcast %29 : f32 to vector<2x128xf32>
    %31 = arith.mulf %1, %30 : vector<2x128xf32>
    %c1_27 = arith.constant 1 : index
    %c1_28 = arith.constant 1 : index
    %32 = memref.load %arg3[%c1_27, %c1_28] : memref<4x8xf32, #tpu.memory_space<smem>>
    %33 = vector.broadcast %32 : f32 to vector<2x128xf32>
    %34 = arith.mulf %3, %33 : vector<2x128xf32>
    %35 = arith.addf %31, %34 : vector<2x128xf32>
    %c2_29 = arith.constant 2 : index
    %c1_30 = arith.constant 1 : index
    %36 = memref.load %arg3[%c2_29, %c1_30] : memref<4x8xf32, #tpu.memory_space<smem>>
    %37 = vector.broadcast %36 : f32 to vector<2x128xf32>
    %38 = arith.mulf %5, %37 : vector<2x128xf32>
    %39 = arith.addf %35, %38 : vector<2x128xf32>
    %c3_31 = arith.constant 3 : index
    %c1_32 = arith.constant 1 : index
    %40 = memref.load %arg3[%c3_31, %c1_32] : memref<4x8xf32, #tpu.memory_space<smem>>
    %41 = vector.broadcast %40 : f32 to vector<2x128xf32>
    %42 = arith.mulf %7, %41 : vector<2x128xf32>
    %43 = arith.addf %39, %42 : vector<2x128xf32>
    %c1_33 = arith.constant 1 : index
    %44 = memref.load %arg4[%c1_33] : memref<8xf32, #tpu.memory_space<smem>>
    %45 = vector.broadcast %44 : f32 to vector<2x128xf32>
    %46 = arith.addf %43, %45 : vector<2x128xf32>
    %c0_34 = arith.constant 0 : index
    %c1_35 = arith.constant 1 : index
    %c0_36 = arith.constant 0 : index
    %c0_37 = arith.constant 0 : index
    %47 = vector.load %arg5[%c0_34, %c1_35, %c0_36, %c0_37] : memref<1x8x2x128xf32, #tpu.memory_space<vmem>>, vector<1x1x2x128xf32>
    %48 = vector.shape_cast %47 : vector<1x1x2x128xf32> to vector<2x128xf32>
    %49 = vector.shape_cast %46 : vector<2x128xf32> to vector<1x1x2x128xf32>
    tpu.vector_store %arg5[%c0_34, %c1_35, %c0_36, %c0_37], %49 {strides = array<i32>} : memref<1x8x2x128xf32, #tpu.memory_space<vmem>>, vector<1x1x2x128xf32>,
    %c0_38 = arith.constant 0 : index
    %c2_39 = arith.constant 2 : index
    %50 = memref.load %arg3[%c0_38, %c2_39] : memref<4x8xf32, #tpu.memory_space<smem>>
    %51 = vector.broadcast %50 : f32 to vector<2x128xf32>
    %52 = arith.mulf %1, %51 : vector<2x128xf32>
    %c1_40 = arith.constant 1 : index
    %c2_41 = arith.constant 2 : index
    %53 = memref.load %arg3[%c1_40, %c2_41] : memref<4x8xf32, #tpu.memory_space<smem>>
    %54 = vector.broadcast %53 : f32 to vector<2x128xf32>
    %55 = arith.mulf %3, %54 : vector<2x128xf32>
    %56 = arith.addf %52, %55 : vector<2x128xf32>
    %c2_42 = arith.constant 2 : index
    %c2_43 = arith.constant 2 : index
    %57 = memref.load %arg3[%c2_42, %c2_43] : memref<4x8xf32, #tpu.memory_space<smem>>
    %58 = vector.broadcast %57 : f32 to vector<2x128xf32>
    %59 = arith.mulf %5, %58 : vector<2x128xf32>
    %60 = arith.addf %56, %59 : vector<2x128xf32>
    %c3_44 = arith.constant 3 : index
    %c2_45 = arith.constant 2 : index
    %61 = memref.load %arg3[%c3_44, %c2_45] : memref<4x8xf32, #tpu.memory_space<smem>>
    %62 = vector.broadcast %61 : f32 to vector<2x128xf32>
    %63 = arith.mulf %7, %62 : vector<2x128xf32>
    %64 = arith.addf %60, %63 : vector<2x128xf32>
    %c2_46 = arith.constant 2 : index
    %65 = memref.load %arg4[%c2_46] : memref<8xf32, #tpu.memory_space<smem>>
    %66 = vector.broadcast %65 : f32 to vector<2x128xf32>
    %67 = arith.addf %64, %66 : vector<2x128xf32>
    %c0_47 = arith.constant 0 : index
    %c2_48 = arith.constant 2 : index
    %c0_49 = arith.constant 0 : index
    %c0_50 = arith.constant 0 : index
    %68 = vector.load %arg5[%c0_47, %c2_48, %c0_49, %c0_50] : memref<1x8x2x128xf32, #tpu.memory_space<vmem>>, vector<1x1x2x128xf32>
    %69 = vector.shape_cast %68 : vector<1x1x2x128xf32> to vector<2x128xf32>
    %70 = vector.shape_cast %67 : vector<2x128xf32> to vector<1x1x2x128xf32>
    tpu.vector_store %arg5[%c0_47, %c2_48, %c0_49, %c0_50], %70 {strides = array<i32>} : memref<1x8x2x128xf32, #tpu.memory_space<vmem>>, vector<1x1x2x128xf32>,
    %c0_51 = arith.constant 0 : index
    %c3_52 = arith.constant 3 : index
    %71 = memref.load %arg3[%c0_51, %c3_52] : memref<4x8xf32, #tpu.memory_space<smem>>
    %72 = vector.broadcast %71 : f32 to vector<2x128xf32>
    %73 = arith.mulf %1, %72 : vector<2x128xf32>
    %c1_53 = arith.constant 1 : index
    %c3_54 = arith.constant 3 : index
    %74 = memref.load %arg3[%c1_53, %c3_54] : memref<4x8xf32, #tpu.memory_space<smem>>
    %75 = vector.broadcast %74 : f32 to vector<2x128xf32>
    %76 = arith.mulf %3, %75 : vector<2x128xf32>
    %77 = arith.addf %73, %76 : vector<2x128xf32>
    %c2_55 = arith.constant 2 : index
    %c3_56 = arith.constant 3 : index
    %78 = memref.load %arg3[%c2_55, %c3_56] : memref<4x8xf32, #tpu.memory_space<smem>>
    %79 = vector.broadcast %78 : f32 to vector<2x128xf32>
    %80 = arith.mulf %5, %79 : vector<2x128xf32>
    %81 = arith.addf %77, %80 : vector<2x128xf32>
    %c3_57 = arith.constant 3 : index
    %c3_58 = arith.constant 3 : index
    %82 = memref.load %arg3[%c3_57, %c3_58] : memref<4x8xf32, #tpu.memory_space<smem>>
    %83 = vector.broadcast %82 : f32 to vector<2x128xf32>
    %84 = arith.mulf %7, %83 : vector<2x128xf32>
    %85 = arith.addf %81, %84 : vector<2x128xf32>
    %c3_59 = arith.constant 3 : index
    %86 = memref.load %arg4[%c3_59] : memref<8xf32, #tpu.memory_space<smem>>
    %87 = vector.broadcast %86 : f32 to vector<2x128xf32>
    %88 = arith.addf %85, %87 : vector<2x128xf32>
    %c0_60 = arith.constant 0 : index
    %c3_61 = arith.constant 3 : index
    %c0_62 = arith.constant 0 : index
    %c0_63 = arith.constant 0 : index
    %89 = vector.load %arg5[%c0_60, %c3_61, %c0_62, %c0_63] : memref<1x8x2x128xf32, #tpu.memory_space<vmem>>, vector<1x1x2x128xf32>
    %90 = vector.shape_cast %89 : vector<1x1x2x128xf32> to vector<2x128xf32>
    %91 = vector.shape_cast %88 : vector<2x128xf32> to vector<1x1x2x128xf32>
    tpu.vector_store %arg5[%c0_60, %c3_61, %c0_62, %c0_63], %91 {strides = array<i32>} : memref<1x8x2x128xf32, #tpu.memory_space<vmem>>, vector<1x1x2x128xf32>,
    %c0_64 = arith.constant 0 : index
    %c4 = arith.constant 4 : index
    %92 = memref.load %arg3[%c0_64, %c4] : memref<4x8xf32, #tpu.memory_space<smem>>
    %93 = vector.broadcast %92 : f32 to vector<2x128xf32>
    %94 = arith.mulf %1, %93 : vector<2x128xf32>
    %c1_65 = arith.constant 1 : index
    %c4_66 = arith.constant 4 : index
    %95 = memref.load %arg3[%c1_65, %c4_66] : memref<4x8xf32, #tpu.memory_space<smem>>
    %96 = vector.broadcast %95 : f32 to vector<2x128xf32>
    %97 = arith.mulf %3, %96 : vector<2x128xf32>
    %98 = arith.addf %94, %97 : vector<2x128xf32>
    %c2_67 = arith.constant 2 : index
    %c4_68 = arith.constant 4 : index
    %99 = memref.load %arg3[%c2_67, %c4_68] : memref<4x8xf32, #tpu.memory_space<smem>>
    %100 = vector.broadcast %99 : f32 to vector<2x128xf32>
    %101 = arith.mulf %5, %100 : vector<2x128xf32>
    %102 = arith.addf %98, %101 : vector<2x128xf32>
    %c3_69 = arith.constant 3 : index
    %c4_70 = arith.constant 4 : index
    %103 = memref.load %arg3[%c3_69, %c4_70] : memref<4x8xf32, #tpu.memory_space<smem>>
    %104 = vector.broadcast %103 : f32 to vector<2x128xf32>
    %105 = arith.mulf %7, %104 : vector<2x128xf32>
    %106 = arith.addf %102, %105 : vector<2x128xf32>
    %c4_71 = arith.constant 4 : index
    %107 = memref.load %arg4[%c4_71] : memref<8xf32, #tpu.memory_space<smem>>
    %108 = vector.broadcast %107 : f32 to vector<2x128xf32>
    %109 = arith.addf %106, %108 : vector<2x128xf32>
    %c0_72 = arith.constant 0 : index
    %c4_73 = arith.constant 4 : index
    %c0_74 = arith.constant 0 : index
    %c0_75 = arith.constant 0 : index
    %110 = vector.load %arg5[%c0_72, %c4_73, %c0_74, %c0_75] : memref<1x8x2x128xf32, #tpu.memory_space<vmem>>, vector<1x1x2x128xf32>
    %111 = vector.shape_cast %110 : vector<1x1x2x128xf32> to vector<2x128xf32>
    %112 = vector.shape_cast %109 : vector<2x128xf32> to vector<1x1x2x128xf32>
    tpu.vector_store %arg5[%c0_72, %c4_73, %c0_74, %c0_75], %112 {strides = array<i32>} : memref<1x8x2x128xf32, #tpu.memory_space<vmem>>, vector<1x1x2x128xf32>,
    %c0_76 = arith.constant 0 : index
    %c5 = arith.constant 5 : index
    %113 = memref.load %arg3[%c0_76, %c5] : memref<4x8xf32, #tpu.memory_space<smem>>
    %114 = vector.broadcast %113 : f32 to vector<2x128xf32>
    %115 = arith.mulf %1, %114 : vector<2x128xf32>
    %c1_77 = arith.constant 1 : index
    %c5_78 = arith.constant 5 : index
    %116 = memref.load %arg3[%c1_77, %c5_78] : memref<4x8xf32, #tpu.memory_space<smem>>
    %117 = vector.broadcast %116 : f32 to vector<2x128xf32>
    %118 = arith.mulf %3, %117 : vector<2x128xf32>
    %119 = arith.addf %115, %118 : vector<2x128xf32>
    %c2_79 = arith.constant 2 : index
    %c5_80 = arith.constant 5 : index
    %120 = memref.load %arg3[%c2_79, %c5_80] : memref<4x8xf32, #tpu.memory_space<smem>>
    %121 = vector.broadcast %120 : f32 to vector<2x128xf32>
    %122 = arith.mulf %5, %121 : vector<2x128xf32>
    %123 = arith.addf %119, %122 : vector<2x128xf32>
    %c3_81 = arith.constant 3 : index
    %c5_82 = arith.constant 5 : index
    %124 = memref.load %arg3[%c3_81, %c5_82] : memref<4x8xf32, #tpu.memory_space<smem>>
    %125 = vector.broadcast %124 : f32 to vector<2x128xf32>
    %126 = arith.mulf %7, %125 : vector<2x128xf32>
    %127 = arith.addf %123, %126 : vector<2x128xf32>
    %c5_83 = arith.constant 5 : index
    %128 = memref.load %arg4[%c5_83] : memref<8xf32, #tpu.memory_space<smem>>
    %129 = vector.broadcast %128 : f32 to vector<2x128xf32>
    %130 = arith.addf %127, %129 : vector<2x128xf32>
    %c0_84 = arith.constant 0 : index
    %c5_85 = arith.constant 5 : index
    %c0_86 = arith.constant 0 : index
    %c0_87 = arith.constant 0 : index
    %131 = vector.load %arg5[%c0_84, %c5_85, %c0_86, %c0_87] : memref<1x8x2x128xf32, #tpu.memory_space<vmem>>, vector<1x1x2x128xf32>
    %132 = vector.shape_cast %131 : vector<1x1x2x128xf32> to vector<2x128xf32>
    %133 = vector.shape_cast %130 : vector<2x128xf32> to vector<1x1x2x128xf32>
    tpu.vector_store %arg5[%c0_84, %c5_85, %c0_86, %c0_87], %133 {strides = array<i32>} : memref<1x8x2x128xf32, #tpu.memory_space<vmem>>, vector<1x1x2x128xf32>,
    %c0_88 = arith.constant 0 : index
    %c6 = arith.constant 6 : index
    %134 = memref.load %arg3[%c0_88, %c6] : memref<4x8xf32, #tpu.memory_space<smem>>
    %135 = vector.broadcast %134 : f32 to vector<2x128xf32>
    %136 = arith.mulf %1, %135 : vector<2x128xf32>
    %c1_89 = arith.constant 1 : index
    %c6_90 = arith.constant 6 : index
    %137 = memref.load %arg3[%c1_89, %c6_90] : memref<4x8xf32, #tpu.memory_space<smem>>
    %138 = vector.broadcast %137 : f32 to vector<2x128xf32>
    %139 = arith.mulf %3, %138 : vector<2x128xf32>
    %140 = arith.addf %136, %139 : vector<2x128xf32>
    %c2_91 = arith.constant 2 : index
    %c6_92 = arith.constant 6 : index
    %141 = memref.load %arg3[%c2_91, %c6_92] : memref<4x8xf32, #tpu.memory_space<smem>>
    %142 = vector.broadcast %141 : f32 to vector<2x128xf32>
    %143 = arith.mulf %5, %142 : vector<2x128xf32>
    %144 = arith.addf %140, %143 : vector<2x128xf32>
    %c3_93 = arith.constant 3 : index
    %c6_94 = arith.constant 6 : index
    %145 = memref.load %arg3[%c3_93, %c6_94] : memref<4x8xf32, #tpu.memory_space<smem>>
    %146 = vector.broadcast %145 : f32 to vector<2x128xf32>
    %147 = arith.mulf %7, %146 : vector<2x128xf32>
    %148 = arith.addf %144, %147 : vector<2x128xf32>
    %c6_95 = arith.constant 6 : index
    %149 = memref.load %arg4[%c6_95] : memref<8xf32, #tpu.memory_space<smem>>
    %150 = vector.broadcast %149 : f32 to vector<2x128xf32>
    %151 = arith.addf %148, %150 : vector<2x128xf32>
    %c0_96 = arith.constant 0 : index
    %c6_97 = arith.constant 6 : index
    %c0_98 = arith.constant 0 : index
    %c0_99 = arith.constant 0 : index
    %152 = vector.load %arg5[%c0_96, %c6_97, %c0_98, %c0_99] : memref<1x8x2x128xf32, #tpu.memory_space<vmem>>, vector<1x1x2x128xf32>
    %153 = vector.shape_cast %152 : vector<1x1x2x128xf32> to vector<2x128xf32>
    %154 = vector.shape_cast %151 : vector<2x128xf32> to vector<1x1x2x128xf32>
    tpu.vector_store %arg5[%c0_96, %c6_97, %c0_98, %c0_99], %154 {strides = array<i32>} : memref<1x8x2x128xf32, #tpu.memory_space<vmem>>, vector<1x1x2x128xf32>,
    %c0_100 = arith.constant 0 : index
    %c7 = arith.constant 7 : index
    %155 = memref.load %arg3[%c0_100, %c7] : memref<4x8xf32, #tpu.memory_space<smem>>
    %156 = vector.broadcast %155 : f32 to vector<2x128xf32>
    %157 = arith.mulf %1, %156 : vector<2x128xf32>
    %c1_101 = arith.constant 1 : index
    %c7_102 = arith.constant 7 : index
    %158 = memref.load %arg3[%c1_101, %c7_102] : memref<4x8xf32, #tpu.memory_space<smem>>
    %159 = vector.broadcast %158 : f32 to vector<2x128xf32>
    %160 = arith.mulf %3, %159 : vector<2x128xf32>
    %161 = arith.addf %157, %160 : vector<2x128xf32>
    %c2_103 = arith.constant 2 : index
    %c7_104 = arith.constant 7 : index
    %162 = memref.load %arg3[%c2_103, %c7_104] : memref<4x8xf32, #tpu.memory_space<smem>>
    %163 = vector.broadcast %162 : f32 to vector<2x128xf32>
    %164 = arith.mulf %5, %163 : vector<2x128xf32>
    %165 = arith.addf %161, %164 : vector<2x128xf32>
    %c3_105 = arith.constant 3 : index
    %c7_106 = arith.constant 7 : index
    %166 = memref.load %arg3[%c3_105, %c7_106] : memref<4x8xf32, #tpu.memory_space<smem>>
    %167 = vector.broadcast %166 : f32 to vector<2x128xf32>
    %168 = arith.mulf %7, %167 : vector<2x128xf32>
    %169 = arith.addf %165, %168 : vector<2x128xf32>
    %c7_107 = arith.constant 7 : index
    %170 = memref.load %arg4[%c7_107] : memref<8xf32, #tpu.memory_space<smem>>
    %171 = vector.broadcast %170 : f32 to vector<2x128xf32>
    %172 = arith.addf %169, %171 : vector<2x128xf32>
    %c0_108 = arith.constant 0 : index
    %c7_109 = arith.constant 7 : index
    %c0_110 = arith.constant 0 : index
    %c0_111 = arith.constant 0 : index
    %173 = vector.load %arg5[%c0_108, %c7_109, %c0_110, %c0_111] : memref<1x8x2x128xf32, #tpu.memory_space<vmem>>, vector<1x1x2x128xf32>
    %174 = vector.shape_cast %173 : vector<1x1x2x128xf32> to vector<2x128xf32>
    %175 = vector.shape_cast %172 : vector<2x128xf32> to vector<1x1x2x128xf32>
    tpu.vector_store %arg5[%c0_108, %c7_109, %c0_110, %c0_111], %175 {strides = array<i32>} : memref<1x8x2x128xf32, #tpu.memory_space<vmem>>, vector<1x1x2x128xf32>,
    return
  }
  func.func @transform_0(%arg0: i32, %arg1: i32) -> (i32, i32, i32, i32) {
    %c0_i32 = arith.constant 0 : i32
    %c0_i32_0 = arith.constant 0 : i32
    %c0_i32_1 = arith.constant 0 : i32
    return %arg0, %c0_i32, %arg1, %c0_i32_0 : i32, i32, i32, i32
  }
  func.func @transform_1(%arg0: i32, %arg1: i32) -> (i32, i32) {
    %c0_i32 = arith.constant 0 : i32
    %c0_i32_0 = arith.constant 0 : i32
    %c0_i32_1 = arith.constant 0 : i32
    return %c0_i32, %c0_i32_0 : i32, i32
  }
  func.func @transform_2(%arg0: i32, %arg1: i32) -> i32 {
    %c0_i32 = arith.constant 0 : i32
    %c0_i32_0 = arith.constant 0 : i32
    return %c0_i32 : i32
  }
  func.func @transform_3(%arg0: i32, %arg1: i32) -> (i32, i32, i32, i32) {
    %c0_i32 = arith.constant 0 : i32
    %c0_i32_0 = arith.constant 0 : i32
    %c0_i32_1 = arith.constant 0 : i32
    return %arg0, %c0_i32, %arg1, %c0_i32_0 : i32, i32, i32, i32
  }
}

</mosaic_0001>

<llo_original>
// kernel: tpu_custom_call.1
$region0: #{tpu_custom_call.1}
  #allocation0 [shape = 'u32[]', space=smem, size = 0x4, offset = 0x4, fixed_abs, tag = 'smem constant byte address 0x4 - core index']
  #allocation1 [shape = 'u32[72,128]{1,0:T(1,128)}', space=vmem, size = 0x9000, scoped, tag = 'internal scratch']
  %s0 = inlined_call_operand.hbm [shape: f32[2,4,2,128], index: 0, kind: input, shape index: {}]
  %s1 = inlined_call_operand.hbm [shape: f32[4,8], index: 1, kind: input, shape index: {}]
  %s2 = inlined_call_operand.vmem [shape: f32[8], index: 2, kind: input, shape index: {}]
  %s3 = inlined_call_operand.hbm [shape: f32[2,8,2,128], index: 3, kind: output, shape index: {}]
  %s4 = sld [smem:[#allocation0]]
  $region57: #{tpu_custom_call.1} parent=0
    _
  %s6 = ssub.s32 1, %s4
  %s7 = scalar_select 0, %s6, %s4
  $region1: #{tpu_custom_call.1} parent=0
    #allocation2 [shape = 'u8[8192]{0}', space=vmem, size = 0x2000, scoped, tag = 'input window, operand 0']
    #allocation3 [shape = 's32[2]{0}', space=sflag, size = 0x8, scoped, tag = 'scoped memory for tpu_custom_call.1']
    #allocation4 [shape = 's32[2]{0}', space=sflag, size = 0x8, scoped, tag = 'scoped memory for tpu_custom_call.1']
    #allocation5 [shape = 's32[2]{0}', space=sflag, size = 0x8, scoped, tag = 'scoped memory for tpu_custom_call.1']
    #allocation6 [shape = 's32[2]{0}', space=sflag, size = 0x8, scoped, tag = 'scoped memory for tpu_custom_call.1']
    #allocation7 [shape = 'u8[2048]{0}', space=smem, size = 0x800, scoped, tag = 'input window, operand 1, single buffered']
    #allocation8 [shape = 'u8[512]{0}', space=smem, size = 0x200, scoped, tag = 'input window, operand 2, single buffered']
    #allocation9 [shape = 'u8[16384]{0}', space=vmem, size = 0x4000, scoped, tag = 'output window, operand 0']
    %8 = vsyncpa [#allocation3], 0
    %s9 = scalar_lea.sflag [#allocation3], 1
    %10 = vsyncpa %s9, 0
    %11 = vsyncpa [#allocation5], 0
    %12 = vsyncpa [#allocation6], 0
    %13 = vsyncpa [#allocation4], 0
    %s14 = scalar_lea.sflag [#allocation4], 1
    %15 = vsyncpa %s14, 0
    loop: start=0, step=1, limit=4
    $region2: #{tpu_custom_call.1} parent=1 // loop_pre_header
      _
    $region3: #{tpu_custom_call.1} parent=1 // loop_header
      %s17 = sphi 0, %s21
      %p18 = scmp.ge.s32.totalorder %s17, 4
      %s24 = sphi 0, %s36
      %s25 = sphi 0, %s32
      %s26 = sphi 0, %s24
      %s27 = sphi 0, %s25
      %s28 = sphi 0, %s26
      %s29 = sphi 0, %s27
      %s41 = sphi 0, %s43
      %s44 = sphi 0, %s41
      %s45 = sphi 0, %s44
      %s61 = sphi 0, %s45
      %s65 = sphi 0, %s65
      %s67 = sphi 0, %s65
      %s68 = sphi 0, %s67
      %s82 = sphi 0, %s68
      %s86 = sphi 0, %s86
      %s88 = sphi 0, %s86
      %s89 = sphi 0, %s88
      %s103 = sphi 0, %s89
      %s111 = sphi 0, %s113
      %s114 = sphi 0, %s111
      %s115 = sphi 0, %s114
      %s131 = sphi 0, %s115
    $region4: #{tpu_custom_call.1} parent=1 // loop_header_branch
      %20 = sbr.rel (%p18) target = $region8
    $region5: #{tpu_custom_call.1} parent=1 // loop_body
      %s22 = ssub.s32 %s17, 1
      %s23 = ssub.s32 %s17, 2
      %s30 = sadd.s32 1, %s25
      %p31 = scmp.ge.s32.totalorder %s30, 1
      %s32 = scalar_select %p31, 0, %s30
      %s33 = sadd.s32 1, %s24
      %s34 = scalar_select %p31, %s33, %s24
      %p35 = scmp.ge.s32.totalorder %s34, 2
      %s36 = scalar_select %p35, 0, %s34
      %s37 = ssub.s32 %s24, %s36
      %s38 = ssub.s32 %s25, %s32
      %s39 = sor.u32 %s37, %s38
      %p40 = scmp.eq.s32.totalorder %s39, 0
      %s42 = sadd.s32 %s41, 1
      %s43 = scalar_select %p40, %s41, %s42
      %p46 = pneg %p40
      %p47 = scmp.eq.s32.totalorder %s17, 1
      %p48 = por %p46, %p47
      %p49 = scmp.ne.s32.totalorder %s41, %s44
      %p50 = scmp.eq.s32.totalorder %s17, 0
      %p51 = por %p49, %p50
      %p52 = scmp.ne.s32.totalorder %s41, %s44
      %p53 = scmp.eq.s32.totalorder %s22, 1
      %p54 = por %p52, %p53
      %p55 = scmp.ne.s32.totalorder %s44, %s45
      %p56 = scmp.eq.s32.totalorder %s22, 0
      %p57 = por %p55, %p56
      %p58 = scmp.ne.s32.totalorder %s44, %s45
      %p59 = scmp.eq.s32.totalorder %s23, 1
      %p60 = por %p58, %p59
      %p62 = scmp.ne.s32.totalorder %s45, %s61
      %p63 = scmp.eq.s32.totalorder %s23, 0
      %p64 = por %p62, %p63
      %s66 = sadd.s32 %s65, 1
      %p69 = scmp.eq.s32.totalorder %s17, 1
      %p70 = scmp.ne.s32.totalorder %s65, %s67
      %p71 = scmp.eq.s32.totalorder %s17, 0
      %p72 = por %p70, %p71
      %p73 = scmp.ne.s32.totalorder %s65, %s67
      %p74 = scmp.eq.s32.totalorder %s22, 1
      %p75 = por %p73, %p74
      %p76 = scmp.ne.s32.totalorder %s67, %s68
      %p77 = scmp.eq.s32.totalorder %s22, 0
      %p78 = por %p76, %p77
      %p79 = scmp.ne.s32.totalorder %s67, %s68
      %p80 = scmp.eq.s32.totalorder %s23, 1
      %p81 = por %p79, %p80
      %p83 = scmp.ne.s32.totalorder %s68, %s82
      %p84 = scmp.eq.s32.totalorder %s23, 0
      %p85 = por %p83, %p84
      %s87 = sadd.s32 %s86, 1
      %p90 = scmp.eq.s32.totalorder %s17, 1
      %p91 = scmp.ne.s32.totalorder %s86, %s88
      %p92 = scmp.eq.s32.totalorder %s17, 0
      %p93 = por %p91, %p92
      %p94 = scmp.ne.s32.totalorder %s86, %s88
      %p95 = scmp.eq.s32.totalorder %s22, 1
      %p96 = por %p94, %p95
      %p97 = scmp.ne.s32.totalorder %s88, %s89
      %p98 = scmp.eq.s32.totalorder %s22, 0
      %p99 = por %p97, %p98
      %p100 = scmp.ne.s32.totalorder %s88, %s89
      %p101 = scmp.eq.s32.totalorder %s23, 1
      %p102 = por %p100, %p101
      %p104 = scmp.ne.s32.totalorder %s89, %s103
      %p105 = scmp.eq.s32.totalorder %s23, 0
      %p106 = por %p104, %p105
      %s107 = ssub.s32 %s24, %s36
      %s108 = ssub.s32 %s25, %s32
      %s109 = sor.u32 %s107, %s108
      %p110 = scmp.eq.s32.totalorder %s109, 0
      %s112 = sadd.s32 %s111, 1
      %s113 = scalar_select %p110, %s111, %s112
      %p116 = pneg %p110
      %p117 = scmp.eq.s32.totalorder %s17, 1
      %p118 = por %p116, %p117
      %p119 = scmp.ne.s32.totalorder %s111, %s114
      %p120 = scmp.eq.s32.totalorder %s17, 0
      %p121 = por %p119, %p120
      %p122 = scmp.ne.s32.totalorder %s111, %s114
      %p123 = scmp.eq.s32.totalorder %s22, 1
      %p124 = por %p122, %p123
      %p125 = scmp.ne.s32.totalorder %s114, %s115
      %p126 = scmp.eq.s32.totalorder %s22, 0
      %p127 = por %p125, %p126
      %p128 = scmp.ne.s32.totalorder %s114, %s115
      %p129 = scmp.eq.s32.totalorder %s23, 1
      %p130 = por %p128, %p129
      %p132 = scmp.ne.s32.totalorder %s115, %s131
      %p133 = scmp.eq.s32.totalorder %s23, 0
      %p134 = por %p132, %p133
      %p135 = scmp.le.s32.totalorder 1, %s17
      %p136 = scmp.lt.s32.totalorder %s17, 3
      %p137 = pnand %p135, %p136
      %p138 = pneg %p137
      // Predicated region
      $region9: #{tpu_custom_call.1} parent=5 // pred_check
        _
      $region10: #{tpu_custom_call.1} parent=5 // pred_check_branch
        %140 = sbr.rel (%p137) target = $region12
      $region11: #{tpu_custom_call.1} parent=5 // pred_region
        %s141 = ssub.s32 %s17, 1
        // Predicated region
        $region13: #{tpu_custom_call.1} parent=11 // pred_check
          %p142 = pneg %p78
        $region14: #{tpu_custom_call.1} parent=11 // pred_check_branch
          %144 = sbr.rel (%p142) target = $region16
        $region15: #{tpu_custom_call.1} parent=11 // pred_region
          %146 = vsyncadd [#allocation5], 0
          %s148 = sshll.u32 %s1, 4
          %s149 = int_to_ptr.hbm [resolvable:$true] %s148
          %151 = dma.hbm_to_smem %s149, 64, [#allocation7], [#allocation5]
        $region16: #{tpu_custom_call.1} parent=11 // pred_fallthru
          _
        // Predicated region
        $region17: #{tpu_custom_call.1} parent=11 // pred_check
          %p152 = pneg %p99
        $region18: #{tpu_custom_call.1} parent=11 // pred_check_branch
          %154 = sbr.rel (%p152) target = $region20
        $region19: #{tpu_custom_call.1} parent=11 // pred_region
          %156 = vsyncadd [#allocation6], 0
          %s158 = sshll.u32 %s2, 4
          %s159 = int_to_ptr.vmem [resolvable:$true] %s158
          %161 = dma.vmem_to_smem %s159, 16, [#allocation8], [#allocation6]
        $region20: #{tpu_custom_call.1} parent=11 // pred_fallthru
          _
      $region12: #{tpu_custom_call.1} parent=5 // pred_fallthru
        _
      %p162 = scmp.lt.s32.totalorder %s17, 2
      // Predicated region
      $region21: #{tpu_custom_call.1} parent=5 // pred_check
        %p163 = pneg %p162
      $region22: #{tpu_custom_call.1} parent=5 // pred_check_branch
        %165 = sbr.rel (%p163) target = $region24
      $region23: #{tpu_custom_call.1} parent=5 // pred_region
        // Predicated region
        $region25: #{tpu_custom_call.1} parent=23 // pred_check
          %p166 = pneg %p51
        $region26: #{tpu_custom_call.1} parent=23 // pred_check_branch
          %168 = sbr.rel (%p166) target = $region28
        $region27: #{tpu_custom_call.1} parent=23 // pred_region
          %s169 = sand.u32 %s41, 1
          %s170 = scalar_lea.sflag [#allocation3], %s169
          %s171 = sand.u32 %s41, 1
          %s172 = smul.addr %s171, 8
          %s173 = scalar_lea.vmem [#allocation2], %s172
          %175 = vsyncadd %s170, 0
          %s176 = smul.addr %s24, 4
          %s177 = sadd.s32 %s25, %s176
          %s178 = smul.addr %s177, 2
          %s179 = scalar_lea.hbm %s0, %s178
          %s180 = sshll.u32 %s179, 4
          %s181 = int_to_ptr.hbm [resolvable:$true] %s180
          %s182 = sshll.u32 %s173, 4
          %s183 = int_to_ptr.vmem [resolvable:$true] %s182
          %188 = dma.hbm_to_vmem [thread:$0]  %s181, 128, %s183, %s170, 32, 32, 2
        $region28: #{tpu_custom_call.1} parent=23 // pred_fallthru
          _
      $region24: #{tpu_custom_call.1} parent=5 // pred_fallthru
        _
      %p189 = scmp.le.s32.totalorder 1, %s17
      %p190 = scmp.lt.s32.totalorder %s17, 3
      %p191 = pnand %p189, %p190
      %p192 = pneg %p191
      // Predicated region
      $region29: #{tpu_custom_call.1} parent=5 // pred_check
        _
      $region30: #{tpu_custom_call.1} parent=5 // pred_check_branch
        %194 = sbr.rel (%p191) target = $region32
      $region31: #{tpu_custom_call.1} parent=5 // pred_region
        %s195 = ssub.s32 %s17, 1
        %s196 = sand.u32 %s44, 1
        %s197 = scalar_lea.sflag [#allocation3], %s196
        %s198 = sand.u32 %s44, 1
        %s199 = smul.addr %s198, 8
        %s200 = scalar_lea.vmem [#allocation2], %s199
        // Predicated region
        $region33: #{tpu_custom_call.1} parent=31 // pred_check
          %p201 = pneg %p57
        $region34: #{tpu_custom_call.1} parent=31 // pred_check_branch
          %203 = sbr.rel (%p201) target = $region36
        $region35: #{tpu_custom_call.1} parent=31 // pred_region
          %205 = dma.done %s197, 128
        $region36: #{tpu_custom_call.1} parent=31 // pred_fallthru
          _
        // Predicated region
        $region37: #{tpu_custom_call.1} parent=31 // pred_check
          %p206 = pneg %p78
        $region38: #{tpu_custom_call.1} parent=31 // pred_check_branch
          %208 = sbr.rel (%p206) target = $region40
        $region39: #{tpu_custom_call.1} parent=31 // pred_region
          %210 = dma.done [#allocation5], 64
        $region40: #{tpu_custom_call.1} parent=31 // pred_fallthru
          _
        // Predicated region
        $region41: #{tpu_custom_call.1} parent=31 // pred_check
          %p211 = pneg %p99
        $region42: #{tpu_custom_call.1} parent=31 // pred_check_branch
          %213 = sbr.rel (%p211) target = $region44
        $region43: #{tpu_custom_call.1} parent=31 // pred_region
          %215 = dma.done [#allocation6], 16
        $region44: #{tpu_custom_call.1} parent=31 // pred_fallthru
          _
        %216 = sfence
        %s217 = sand.u32 %s44, 1
        %s218 = scalar_lea.sflag [#allocation3], %s217
        %s219 = sand.u32 %s44, 1
        %s220 = smul.addr %s219, 8
        %s221 = scalar_lea.vmem [#allocation2], %s220
        %p222 = pneg %p57
        %p223 = pneg %p54
        %p224 = pneg %p78
        %p225 = pneg %p75
        %p226 = pneg %p99
        %p227 = pneg %p96
        %p228 = pneg %p127
        %p229 = pneg %p124
        %s230 = sand.u32 %s114, 1
        %s231 = scalar_lea.sflag [#allocation4], %s230
        %s232 = sand.u32 %s114, 1
        %s233 = smul.addr %s232, 16
        %s234 = scalar_lea.vmem [#allocation9], %s233
        %v235 = vld [vmem:[%s200] sm:$0x3]
        %s236 = scalar_lea.vmem %s200, 2 [#allocation2]
        %v237 = vld [vmem:[%s236] sm:$0x3]
        %s238 = scalar_lea.vmem %s200, 4 [#allocation2]
        %v239 = vld [vmem:[%s238] sm:$0x3]
        %s240 = scalar_lea.vmem %s200, 6 [#allocation2]
        %v241 = vld [vmem:[%s240] sm:$0x3]
        %s242 = sld [smem:[#allocation7]]
        %v243 = vstv %s242
        %v244 = vmul.f32 %v235, %v243
        %s245 = sld [smem:[#allocation7 + $0x80]]
        %v246 = vstv %s245
        %v247 = vmul.f32 %v237, %v246
        %v248 = vadd.f32 %v244, %v247
        %s249 = sld [smem:[#allocation7 + $0x100]]
        %v250 = vstv %s249
        %v251 = vmul.f32 %v239, %v250
        %v252 = vadd.f32 %v248, %v251
        %s253 = sld [smem:[#allocation7 + $0x180]]
        %v254 = vstv %s253
        %v255 = vmul.f32 %v241, %v254
        %v256 = vadd.f32 %v252, %v255
        %s257 = sld [smem:[#allocation8]]
        %v258 = vstv %s257
        %v259 = vadd.f32 %v256, %v258
        %260 = vst [vmem:[%s234] sm:$0x3] %v259
        %s261 = sld [smem:[#allocation7 + $0x1]]
        %v262 = vstv %s261
        %v263 = vmul.f32 %v235, %v262
        %s264 = sld [smem:[#allocation7 + $0x81]]
        %v265 = vstv %s264
        %v266 = vmul.f32 %v237, %v265
        %v267 = vadd.f32 %v263, %v266
        %s268 = sld [smem:[#allocation7 + $0x101]]
        %v269 = vstv %s268
        %v270 = vmul.f32 %v239, %v269
        %v271 = vadd.f32 %v267, %v270
        %s272 = sld [smem:[#allocation7 + $0x181]]
        %v273 = vstv %s272
        %v274 = vmul.f32 %v241, %v273
        %v275 = vadd.f32 %v271, %v274
        %s276 = sld [smem:[#allocation8 + $0x1]]
        %v277 = vstv %s276
        %v278 = vadd.f32 %v275, %v277
        %s279 = scalar_lea.vmem %s234, 2 [#allocation9]
        %280 = vst [vmem:[%s279] sm:$0x3] %v278
        %s281 = sld [smem:[#allocation7 + $0x2]]
        %v282 = vstv %s281
        %v283 = vmul.f32 %v235, %v282
        %s284 = sld [smem:[#allocation7 + $0x82]]
        %v285 = vstv %s284
        %v286 = vmul.f32 %v237, %v285
        %v287 = vadd.f32 %v283, %v286
        %s288 = sld [smem:[#allocation7 + $0x102]]
        %v289 = vstv %s288
        %v290 = vmul.f32 %v239, %v289
        %v291 = vadd.f32 %v287, %v290
        %s292 = sld [smem:[#allocation7 + $0x182]]
        %v293 = vstv %s292
        %v294 = vmul.f32 %v241, %v293
        %v295 = vadd.f32 %v291, %v294
        %s296 = sld [smem:[#allocation8 + $0x2]]
        %v297 = vstv %s296
        %v298 = vadd.f32 %v295, %v297
        %s299 = scalar_lea.vmem %s234, 4 [#allocation9]
        %300 = vst [vmem:[%s299] sm:$0x3] %v298
        %s301 = sld [smem:[#allocation7 + $0x3]]
        %v302 = vstv %s301
        %v303 = vmul.f32 %v235, %v302
        %s304 = sld [smem:[#allocation7 + $0x83]]
        %v305 = vstv %s304
        %v306 = vmul.f32 %v237, %v305
        %v307 = vadd.f32 %v303, %v306
        %s308 = sld [smem:[#allocation7 + $0x103]]
        %v309 = vstv %s308
        %v310 = vmul.f32 %v239, %v309
        %v311 = vadd.f32 %v307, %v310
        %s312 = sld [smem:[#allocation7 + $0x183]]
        %v313 = vstv %s312
        %v314 = vmul.f32 %v241, %v313
        %v315 = vadd.f32 %v311, %v314
        %s316 = sld [smem:[#allocation8 + $0x3]]
        %v317 = vstv %s316
        %v318 = vadd.f32 %v315, %v317
        %s319 = scalar_lea.vmem %s234, 6 [#allocation9]
        %320 = vst [vmem:[%s319] sm:$0x3] %v318
        %s321 = sld [smem:[#allocation7 + $0x4]]
        %v322 = vstv %s321
        %v323 = vmul.f32 %v235, %v322
        %s324 = sld [smem:[#allocation7 + $0x84]]
        %v325 = vstv %s324
        %v326 = vmul.f32 %v237, %v325
        %v327 = vadd.f32 %v323, %v326
        %s328 = sld [smem:[#allocation7 + $0x104]]
        %v329 = vstv %s328
        %v330 = vmul.f32 %v239, %v329
        %v331 = vadd.f32 %v327, %v330
        %s332 = sld [smem:[#allocation7 + $0x184]]
        %v333 = vstv %s332
        %v334 = vmul.f32 %v241, %v333
        %v335 = vadd.f32 %v331, %v334
        %s336 = sld [smem:[#allocation8 + $0x4]]
        %v337 = vstv %s336
        %v338 = vadd.f32 %v335, %v337
        %s339 = scalar_lea.vmem %s234, 8 [#allocation9]
        %340 = vst [vmem:[%s339] sm:$0x3] %v338
        %s341 = sld [smem:[#allocation7 + $0x5]]
        %v342 = vstv %s341
        %v343 = vmul.f32 %v235, %v342
        %s344 = sld [smem:[#allocation7 + $0x85]]
        %v345 = vstv %s344
        %v346 = vmul.f32 %v237, %v345
        %v347 = vadd.f32 %v343, %v346
        %s348 = sld [smem:[#allocation7 + $0x105]]
        %v349 = vstv %s348
        %v350 = vmul.f32 %v239, %v349
        %v351 = vadd.f32 %v347, %v350
        %s352 = sld [smem:[#allocation7 + $0x185]]
        %v353 = vstv %s352
        %v354 = vmul.f32 %v241, %v353
        %v355 = vadd.f32 %v351, %v354
        %s356 = sld [smem:[#allocation8 + $0x5]]
        %v357 = vstv %s356
        %v358 = vadd.f32 %v355, %v357
        %s359 = scalar_lea.vmem %s234, 10 [#allocation9]
        %360 = vst [vmem:[%s359] sm:$0x3] %v358
        %s361 = sld [smem:[#allocation7 + $0x6]]
        %v362 = vstv %s361
        %v363 = vmul.f32 %v235, %v362
        %s364 = sld [smem:[#allocation7 + $0x86]]
        %v365 = vstv %s364
        %v366 = vmul.f32 %v237, %v365
        %v367 = vadd.f32 %v363, %v366
        %s368 = sld [smem:[#allocation7 + $0x106]]
        %v369 = vstv %s368
        %v370 = vmul.f32 %v239, %v369
        %v371 = vadd.f32 %v367, %v370
        %s372 = sld [smem:[#allocation7 + $0x186]]
        %v373 = vstv %s372
        %v374 = vmul.f32 %v241, %v373
        %v375 = vadd.f32 %v371, %v374
        %s376 = sld [smem:[#allocation8 + $0x6]]
        %v377 = vstv %s376
        %v378 = vadd.f32 %v375, %v377
        %s379 = scalar_lea.vmem %s234, 12 [#allocation9]
        %380 = vst [vmem:[%s379] sm:$0x3] %v378
        %s381 = sld [smem:[#allocation7 + $0x7]]
        %v382 = vstv %s381
        %v383 = vmul.f32 %v235, %v382
        %s384 = sld [smem:[#allocation7 + $0x87]]
        %v385 = vstv %s384
        %v386 = vmul.f32 %v237, %v385
        %v387 = vadd.f32 %v383, %v386
        %s388 = sld [smem:[#allocation7 + $0x107]]
        %v389 = vstv %s388
        %v390 = vmul.f32 %v239, %v389
        %v391 = vadd.f32 %v387, %v390
        %s392 = sld [smem:[#allocation7 + $0x187]]
        %v393 = vstv %s392
        %v394 = vmul.f32 %v241, %v393
        %v395 = vadd.f32 %v391, %v394
        %s396 = sld [smem:[#allocation8 + $0x7]]
        %v397 = vstv %s396
        %v398 = vadd.f32 %v395, %v397
        %s399 = scalar_lea.vmem %s234, 14 [#allocation9]
        %400 = vst [vmem:[%s399] sm:$0x3] %v398
        %s401 = sand.u32 %s114, 1
        %s402 = scalar_lea.sflag [#allocation4], %s401
        %s403 = sand.u32 %s114, 1
        %s404 = smul.addr %s403, 16
        %s405 = scalar_lea.vmem [#allocation9], %s404
        // Predicated region
        $region45: #{tpu_custom_call.1} parent=31 // pred_check
          %p406 = pneg %p124
        $region46: #{tpu_custom_call.1} parent=31 // pred_check_branch
          %408 = sbr.rel (%p406) target = $region48
        $region47: #{tpu_custom_call.1} parent=31 // pred_region
          %410 = vsyncadd %s402, 0
          %s411 = smul.addr %s26, 8
          %s412 = sadd.s32 %s27, %s411
          %s413 = smul.addr %s412, 2
          %s414 = scalar_lea.hbm %s3, %s413
          %s415 = sshll.u32 %s405, 4
          %s416 = int_to_ptr.vmem [resolvable:$true] %s415
          %s417 = sshll.u32 %s414, 4
          %s418 = int_to_ptr.hbm [resolvable:$true] %s417
          %423 = dma.vmem_to_hbm [thread:$0]  %s416, 256, %s418, %s402, 32, 32, 2
        $region48: #{tpu_custom_call.1} parent=31 // pred_fallthru
          _
      $region32: #{tpu_custom_call.1} parent=5 // pred_fallthru
        _
      %p424 = scmp.le.s32.totalorder 2, %s17
      // Predicated region
      $region49: #{tpu_custom_call.1} parent=5 // pred_check
        %p425 = pneg %p424
      $region50: #{tpu_custom_call.1} parent=5 // pred_check_branch
        %427 = sbr.rel (%p425) target = $region52
      $region51: #{tpu_custom_call.1} parent=5 // pred_region
        %s428 = ssub.s32 %s17, 2
        // Predicated region
        $region53: #{tpu_custom_call.1} parent=51 // pred_check
          %p429 = pneg %p130
        $region54: #{tpu_custom_call.1} parent=51 // pred_check_branch
          %431 = sbr.rel (%p429) target = $region56
        $region55: #{tpu_custom_call.1} parent=51 // pred_region
          %s432 = sand.u32 %s115, 1
          %s433 = scalar_lea.sflag [#allocation4], %s432
          %s434 = sand.u32 %s115, 1
          %s435 = smul.addr %s434, 16
          %s436 = scalar_lea.vmem [#allocation9], %s435
          %438 = dma.done %s433, 256
        $region56: #{tpu_custom_call.1} parent=51 // pred_fallthru
          _
      $region52: #{tpu_custom_call.1} parent=5 // pred_fallthru
        _
    $region6: #{tpu_custom_call.1} parent=1 // loop_footer
      %s21 = sadd.s32 1, %s17
    $region7: #{tpu_custom_call.1} parent=1 // loop_footer_branch
      %16 = sbr.rel target = $region3
    $region8: #{tpu_custom_call.1} parent=1 // loop_exit
      _
    %439 = vsyncpa [#allocation3], 1
    %s440 = scalar_lea.sflag [#allocation3], 1
    %441 = vsyncpa %s440, 1
    %442 = vsyncpa [#allocation4], 1
    %s443 = scalar_lea.sflag [#allocation4], 1
    %444 = vsyncpa %s443, 1
    %445 = vsyncpa [#allocation5], 1
    %s446 = scalar_lea.sflag [#allocation5], 1
    %447 = vsyncpa %s446, 1
    %448 = vsyncpa [#allocation6], 1
    %s449 = scalar_lea.sflag [#allocation6], 1
    %450 = vsyncpa %s449, 1

</llo_original>
